<compile_context>
chip_gen: v6e
topology: v6e:2x2x1
jax: 0.10.0
libtpu: 0.0.40
codegen_flags: <defaults>
</compile_context>

<pallas_src>
from functools import partial

import jax
import jax.numpy as jnp
from jax.experimental import pallas as pl
from jax.experimental.pallas import tpu as pltpu

_LANE = 128
_SUBLANE = 8


def _drop_path_kernel(u_ref, x_ref, o_ref, *, keep_prob):
    """One batch sample per grid step: out = x * keep / keep_prob.

    u_ref : SMEM f32[B]        per-sample U[0,1) draw
    x_ref : VMEM (1, R, 128)   lane-dense slab of sample b
    """
    b = pl.program_id(0)
    drop_prob = 1.0 - keep_prob
    # keep iff u >= drop_prob  <=>  floor(keep_prob + u) == 1  for u in [0,1)
    scale = jnp.where(u_ref[b] >= drop_prob, 1.0 / keep_prob, 0.0)
    o_ref[...] = (x_ref[...] * scale).astype(o_ref.dtype)


def drop_path(x, drop_prob: float = 0.0, training: bool = False, key=None):
    """Functional DropPath forward. `drop_prob` / `training` are static."""
    if drop_prob == 0.0 or not training:
        return x                                  # identity, same as the PyTorch early return
    if key is None:
        raise ValueError("training-mode drop_path needs a PRNG key")
    keep_prob = 1.0 - drop_prob
    B = x.shape[0]
    orig_shape = x.shape

    # raw per-sample U[0,1) draw (B scalars) -- plain-JAX glue; the x-sized
    # mask/scale math runs inside the kernel.
    u = jax.random.uniform(key, (B,), dtype=jnp.float32)

    # lane-dense layout: flatten trailing dims, zero-pad to a multiple of 8*128,
    # view as (B, R, 128) so the kernel block equals the full last two dims.
    flat = x.reshape(B, -1)
    m = flat.shape[1]
    tile = _SUBLANE * _LANE
    m_pad = ((m + tile - 1) // tile) * tile
    if m_pad != m:
        flat = jnp.pad(flat, ((0, 0), (0, m_pad - m)))
    rows = m_pad // _LANE
    xr = flat.reshape(B, rows, _LANE)

    out = pl.pallas_call(
        partial(_drop_path_kernel, keep_prob=keep_prob),
        grid=(B,),
        in_specs=[
            pl.BlockSpec(memory_space=pltpu.MemorySpace.SMEM),     # u : (B,) in SMEM
            pl.BlockSpec((1, rows, _LANE), lambda b: (b, 0, 0)),   # x slab
        ],
        out_specs=pl.BlockSpec((1, rows, _LANE), lambda b: (b, 0, 0)),
        out_shape=jax.ShapeDtypeStruct((B, rows, _LANE), x.dtype),
        compiler_params=pltpu.CompilerParams(
            dimension_semantics=("parallel",)),
    )(u, xr)

    return out.reshape(B, m_pad)[:, :m].reshape(orig_shape)


class DropPath:
    """Module-style wrapper mirroring the PyTorch nn.Module interface."""

    def __init__(self, drop_prob=None):
        self.drop_prob = 0.0 if drop_prob is None else float(drop_prob)
        self.training = False

    def __call__(self, x, key=None):
        return drop_path(x, self.drop_prob, self.training, key)


if __name__ == "__main__":
    key = jax.random.PRNGKey(0)
    k_x, k_mask = jax.random.split(key)

    # small shapes consistent with DropPath usage: (batch=2, channels=4, 16x16)
    x = jax.random.normal(k_x, (2, 4, 16, 16), jnp.float32)
    drop_prob = 0.25

    fn = jax.jit(drop_path, static_argnames=("drop_prob", "training"))

    # ---- training mode: stochastic depth ----
    out = fn(x, drop_prob=drop_prob, training=True, key=k_mask)
    jax.block_until_ready(out)
    assert out.shape == x.shape and out.dtype == x.dtype

    # pure-JAX reference with the identical per-sample uniform draw
    keep_prob = 1.0 - drop_prob
    u = jax.random.uniform(k_mask, (x.shape[0],), dtype=jnp.float32)
    ref_scale = jnp.where(u >= drop_prob, 1.0 / keep_prob, 0.0)
    ref = x * ref_scale[:, None, None, None]
    assert jnp.allclose(out, ref, atol=1e-6, rtol=1e-6)

    # ---- eval mode: identity ----
    out_eval = fn(x, drop_prob=drop_prob, training=False, key=k_mask)
    jax.block_until_ready(out_eval)
    assert jnp.allclose(out_eval, x)

    # ---- drop_prob == 0: identity even in training ----
    out_p0 = fn(x, drop_prob=0.0, training=True, key=k_mask)
    assert jnp.allclose(out_p0, x)

    print("KERNEL_OK")
</pallas_src>

<mosaic_0001>
module attributes {stable_mosaic.version = 11 : i64} {
  func.func @_drop_path_kernel(%arg0: i32, %arg1: memref<2xf32, #tpu.memory_space<smem>>, %arg2: memref<1x8x128xf32, #tpu.memory_space<vmem>>, %arg3: memref<1x8x128xf32, #tpu.memory_space<vmem>>) attributes {dimension_semantics = [#tpu.dimension_semantics<parallel>], iteration_bounds = array<i64: 2>, scalar_prefetch = 0 : i64, scratch_operands = 0 : i64, tpu.core_type = #tpu.core_type<tc>, window_params = [{transform_indices = @transform_0, window_bounds = array<i64: 2>}, {transform_indices = @transform_1, window_bounds = array<i64: 1, 8, 128>}, {transform_indices = @transform_2, window_bounds = array<i64: 1, 8, 128>}]} {
    %0 = arith.index_cast %arg0 : i32 to index
    %1 = memref.load %arg1[%0] : memref<2xf32, #tpu.memory_space<smem>>
    %cst = arith.constant 2.500000e-01 : f32
    %2 = arith.cmpf oge, %1, %cst : f32
    %cst_0 = arith.constant 1.33333337 : f32
    %cst_1 = arith.constant 0.000000e+00 : f32
    %3 = arith.select %2, %cst_0, %cst_1 : f32
    %c0 = arith.constant 0 : index
    %c0_2 = arith.constant 0 : index
    %c0_3 = arith.constant 0 : index
    %4 = vector.load %arg2[%c0, %c0_2, %c0_3] : memref<1x8x128xf32, #tpu.memory_space<vmem>>, vector<1x8x128xf32>
    %5 = vector.broadcast %3 : f32 to vector<1x8x128xf32>
    %6 = arith.mulf %4, %5 : vector<1x8x128xf32>
    %c0_4 = arith.constant 0 : index
    %c0_5 = arith.constant 0 : index
    %c0_6 = arith.constant 0 : index
    %7 = vector.load %arg3[%c0_4, %c0_5, %c0_6] : memref<1x8x128xf32, #tpu.memory_space<vmem>>, vector<1x8x128xf32>
    tpu.vector_store %arg3[%c0_4, %c0_5, %c0_6], %6 {strides = array<i32>} : memref<1x8x128xf32, #tpu.memory_space<vmem>>, vector<1x8x128xf32>,
    return
  }
  func.func @transform_0(%arg0: i32) -> i32 {
    %c0_i32 = arith.constant 0 : i32
    %c0_i32_0 = arith.constant 0 : i32
    return %c0_i32 : i32
  }
  func.func @transform_1(%arg0: i32) -> (i32, i32, i32) {
    %c0_i32 = arith.constant 0 : i32
    %c0_i32_0 = arith.constant 0 : i32
    %c0_i32_1 = arith.constant 0 : i32
    return %arg0, %c0_i32, %c0_i32_0 : i32, i32, i32
  }
  func.func @transform_2(%arg0: i32) -> (i32, i32, i32) {
    %c0_i32 = arith.constant 0 : i32
    %c0_i32_0 = arith.constant 0 : i32
    %c0_i32_1 = arith.constant 0 : i32
    return %arg0, %c0_i32, %c0_i32_0 : i32, i32, i32
  }
}

</mosaic_0001>

<llo_original>
// kernel: drop_path.1
$region0: #{drop_path.1}
  #allocation0 [shape = 'u32[]', space=smem, size = 0x4, offset = 0x4, fixed_abs, tag = 'smem constant byte address 0x4 - core index']
  #allocation1 [shape = 'u32[144,128]{1,0:T(1,128)}', space=vmem, size = 0x12000, scoped, tag = 'internal scratch']
  %s0 = inlined_call_operand.vmem [shape: f32[2], index: 0, kind: input, shape index: {}]
  %s1 = inlined_call_operand.vmem [shape: f32[2,8,128], index: 1, kind: input, shape index: {}]
  %s2 = inlined_call_operand.vmem [shape: f32[2,8,128], index: 2, kind: output, shape index: {}]
  %s3 = sld [smem:[#allocation0]]
  $region45: #{drop_path.1} parent=0
    _
  %s5 = ssub.s32 1, %s3
  %s6 = scalar_select 0, %s5, %s3
  $region1: #{drop_path.1} parent=0
    #allocation2 [shape = 'u8[512]{0}', space=smem, size = 0x200, scoped, tag = 'input window, operand 0, single buffered']
    #allocation3 [shape = 's32[2]{0}', space=sflag, size = 0x8, scoped, tag = 'scoped memory for drop_path.1']
    %7 = vsyncpa [#allocation3], 0
    loop: start=0, step=1, limit=4
    $region2: #{drop_path.1} parent=1 // loop_pre_header
      _
    $region3: #{drop_path.1} parent=1 // loop_header
      %s9 = sphi 0, %s13
      %p10 = scmp.ge.s32.totalorder %s9, 4
      %s17 = sphi 0, %s17
      %s19 = sphi 0, %s17
      %s20 = sphi 0, %s19
      %s34 = sphi 0, %s20
      %s40 = sphi 0, %s42
      %s43 = sphi 0, %s40
      %s44 = sphi 0, %s43
      %s60 = sphi 0, %s44
      %s66 = sphi 0, %s68
      %s69 = sphi 0, %s66
      %s70 = sphi 0, %s69
      %s86 = sphi 0, %s70
    $region4: #{drop_path.1} parent=1 // loop_header_branch
      %12 = sbr.rel (%p10) target = $region8
    $region5: #{drop_path.1} parent=1 // loop_body
      %s14 = ssub.s32 %s9, 1
      %s15 = ssub.s32 %s9, 2
      %s16 = sadd.s32 %s9, 1
      %s18 = sadd.s32 %s17, 1
      %p21 = scmp.eq.s32.totalorder %s9, 1
      %p22 = scmp.ne.s32.totalorder %s17, %s19
      %p23 = scmp.eq.s32.totalorder %s9, 0
      %p24 = por %p22, %p23
      %p25 = scmp.ne.s32.totalorder %s17, %s19
      %p26 = scmp.eq.s32.totalorder %s14, 1
      %p27 = por %p25, %p26
      %p28 = scmp.ne.s32.totalorder %s19, %s20
      %p29 = scmp.eq.s32.totalorder %s14, 0
      %p30 = por %p28, %p29
      %p31 = scmp.ne.s32.totalorder %s19, %s20
      %p32 = scmp.eq.s32.totalorder %s15, 1
      %p33 = por %p31, %p32
      %p35 = scmp.ne.s32.totalorder %s20, %s34
      %p36 = scmp.eq.s32.totalorder %s15, 0
      %p37 = por %p35, %p36
      %s38 = ssub.s32 %s9, %s16
      %p39 = scmp.eq.s32.totalorder %s38, 0
      %s41 = sadd.s32 %s40, 1
      %s42 = scalar_select %p39, %s40, %s41
      %p45 = pneg %p39
      %p46 = scmp.eq.s32.totalorder %s9, 1
      %p47 = por %p45, %p46
      %p48 = scmp.ne.s32.totalorder %s40, %s43
      %p49 = scmp.eq.s32.totalorder %s9, 0
      %p50 = por %p48, %p49
      %p51 = scmp.ne.s32.totalorder %s40, %s43
      %p52 = scmp.eq.s32.totalorder %s14, 1
      %p53 = por %p51, %p52
      %p54 = scmp.ne.s32.totalorder %s43, %s44
      %p55 = scmp.eq.s32.totalorder %s14, 0
      %p56 = por %p54, %p55
      %p57 = scmp.ne.s32.totalorder %s43, %s44
      %p58 = scmp.eq.s32.totalorder %s15, 1
      %p59 = por %p57, %p58
      %p61 = scmp.ne.s32.totalorder %s44, %s60
      %p62 = scmp.eq.s32.totalorder %s15, 0
      %p63 = por %p61, %p62
      %s64 = ssub.s32 %s9, %s16
      %p65 = scmp.eq.s32.totalorder %s64, 0
      %s67 = sadd.s32 %s66, 1
      %s68 = scalar_select %p65, %s66, %s67
      %p71 = pneg %p65
      %p72 = scmp.eq.s32.totalorder %s9, 1
      %p73 = por %p71, %p72
      %p74 = scmp.ne.s32.totalorder %s66, %s69
      %p75 = scmp.eq.s32.totalorder %s9, 0
      %p76 = por %p74, %p75
      %p77 = scmp.ne.s32.totalorder %s66, %s69
      %p78 = scmp.eq.s32.totalorder %s14, 1
      %p79 = por %p77, %p78
      %p80 = scmp.ne.s32.totalorder %s69, %s70
      %p81 = scmp.eq.s32.totalorder %s14, 0
      %p82 = por %p80, %p81
      %p83 = scmp.ne.s32.totalorder %s69, %s70
      %p84 = scmp.eq.s32.totalorder %s15, 1
      %p85 = por %p83, %p84
      %p87 = scmp.ne.s32.totalorder %s70, %s86
      %p88 = scmp.eq.s32.totalorder %s15, 0
      %p89 = por %p87, %p88
      %p90 = scmp.le.s32.totalorder 1, %s9
      %p91 = scmp.lt.s32.totalorder %s9, 3
      %p92 = pnand %p90, %p91
      %p93 = pneg %p92
      // Predicated region
      $region9: #{drop_path.1} parent=5 // pred_check
        _
      $region10: #{drop_path.1} parent=5 // pred_check_branch
        %95 = sbr.rel (%p92) target = $region12
      $region11: #{drop_path.1} parent=5 // pred_region
        %s96 = ssub.s32 %s9, 1
        // Predicated region
        $region13: #{drop_path.1} parent=11 // pred_check
          %p97 = pneg %p30
        $region14: #{drop_path.1} parent=11 // pred_check_branch
          %99 = sbr.rel (%p97) target = $region16
        $region15: #{drop_path.1} parent=11 // pred_region
          %s101 = ssub.s32 16, 16
          %102 = vsyncadd [#allocation3], %s101
          %s104 = sshll.u32 %s0, 4
          %s105 = int_to_ptr.vmem [resolvable:$true] %s104
          %107 = dma.vmem_to_smem %s105, 16, [#allocation2], [#allocation3]
        $region16: #{drop_path.1} parent=11 // pred_fallthru
          _
      $region12: #{drop_path.1} parent=5 // pred_fallthru
        _
      %p108 = scmp.lt.s32.totalorder %s9, 2
      // Predicated region
      $region17: #{drop_path.1} parent=5 // pred_check
        %p109 = pneg %p108
      $region18: #{drop_path.1} parent=5 // pred_check_branch
        %111 = sbr.rel (%p109) target = $region20
      $region19: #{drop_path.1} parent=5 // pred_region
        // Predicated region
        $region21: #{drop_path.1} parent=19 // pred_check
          %p112 = pneg %p50
        $region22: #{drop_path.1} parent=19 // pred_check_branch
          %114 = sbr.rel (%p112) target = $region24
        $region23: #{drop_path.1} parent=19 // pred_region
          %p115 = scmp.lt.s32.totalorder %s9, 1
          %s116 = scalar_select %p115, %s9, 1
          %s117 = smul.addr %s116, 8
          %s118 = scalar_lea.vmem %s1, %s117
        $region24: #{drop_path.1} parent=19 // pred_fallthru
          _
      $region20: #{drop_path.1} parent=5 // pred_fallthru
        _
      %p119 = scmp.le.s32.totalorder 1, %s9
      %p120 = scmp.lt.s32.totalorder %s9, 3
      %p121 = pnand %p119, %p120
      %p122 = pneg %p121
      // Predicated region
      $region25: #{drop_path.1} parent=5 // pred_check
        _
      $region26: #{drop_path.1} parent=5 // pred_check_branch
        %124 = sbr.rel (%p121) target = $region28
      $region27: #{drop_path.1} parent=5 // pred_region
        %s125 = ssub.s32 %s9, 1
        // Predicated region
        $region29: #{drop_path.1} parent=27 // pred_check
          %p126 = pneg %p30
        $region30: #{drop_path.1} parent=27 // pred_check_branch
          %128 = sbr.rel (%p126) target = $region32
        $region31: #{drop_path.1} parent=27 // pred_region
          %129 = dma.done [#allocation3], 16
        $region32: #{drop_path.1} parent=27 // pred_fallthru
          _
        %130 = sfence
        %p131 = pneg %p30
        %p132 = pneg %p27
        %p133 = scmp.lt.s32.totalorder %s14, 1
        %s134 = scalar_select %p133, %s14, 1
        %s135 = smul.addr %s134, 8
        %s136 = scalar_lea.vmem %s1, %s135
        %p137 = pneg %p56
        %p138 = pneg %p53
        %p139 = pneg %p82
        %p140 = pneg %p79
        %p141 = scmp.lt.s32.totalorder %s14, 1
        %s142 = scalar_select %p141, %s14, 1
        %s143 = smul.addr %s142, 8
        %s144 = scalar_lea.vmem %s2, %s143
        %p145 = scmp.lt.s32.totalorder %s14, 1
        %s146 = scalar_select %p145, %s14, 1
        %s147 = smul.addr %s146, 8
        %s148 = scalar_lea.vmem %s1, %s147
        %p149 = scmp.lt.s32.totalorder %s14, 1
        %s150 = scalar_select %p149, %s14, 1
        %s151 = smul.addr %s150, 8
        %s152 = scalar_lea.vmem %s2, %s151
        %s153 = sld [smem:[#allocation2 + %s14]]
        %p154 = scmp.ge.f32.partialorder %s153, 0.25
        %s155 = scalar_select %p154, 1.3333334, 0.0
        %v156 = vld [vmem:[%s148] sm:$0xff]
        %v157 = vstv %s155
        %v158 = vmul.f32 %v156, %v157
        %159 = vst [vmem:[%s152] sm:$0xff] %v158
        %p160 = scmp.lt.s32.totalorder %s14, 1
        %s161 = scalar_select %p160, %s14, 1
        %s162 = smul.addr %s161, 8
        %s163 = scalar_lea.vmem %s2, %s162
        // Predicated region
        $region33: #{drop_path.1} parent=27 // pred_check
          %p164 = pneg %p79
        $region34: #{drop_path.1} parent=27 // pred_check_branch
          %166 = sbr.rel (%p164) target = $region36
        $region35: #{drop_path.1} parent=27 // pred_region
          _
        $region36: #{drop_path.1} parent=27 // pred_fallthru
          _
      $region28: #{drop_path.1} parent=5 // pred_fallthru
        _
      %p167 = scmp.le.s32.totalorder 2, %s9
      // Predicated region
      $region37: #{drop_path.1} parent=5 // pred_check
        %p168 = pneg %p167
      $region38: #{drop_path.1} parent=5 // pred_check_branch
        %170 = sbr.rel (%p168) target = $region40
      $region39: #{drop_path.1} parent=5 // pred_region
        %s171 = ssub.s32 %s9, 2
        // Predicated region
        $region41: #{drop_path.1} parent=39 // pred_check
          %p172 = pneg %p85
        $region42: #{drop_path.1} parent=39 // pred_check_branch
          %174 = sbr.rel (%p172) target = $region44
        $region43: #{drop_path.1} parent=39 // pred_region
          %p175 = scmp.lt.s32.totalorder %s15, 1
          %s176 = scalar_select %p175, %s15, 1
          %s177 = smul.addr %s176, 8
          %s178 = scalar_lea.vmem %s2, %s177
        $region44: #{drop_path.1} parent=39 // pred_fallthru
          _
      $region40: #{drop_path.1} parent=5 // pred_fallthru
        _
    $region6: #{drop_path.1} parent=1 // loop_footer
      %s13 = sadd.s32 1, %s9
    $region7: #{drop_path.1} parent=1 // loop_footer_branch
      %8 = sbr.rel target = $region3
    $region8: #{drop_path.1} parent=1 // loop_exit
      _
    %179 = vsyncpa [#allocation3], 1
    %s180 = scalar_lea.sflag [#allocation3], 1
    %181 = vsyncpa %s180, 1

</llo_original>
